<compile_context>
chip_gen: v5e
topology: v5e:2x2
jax: 0.10.0
libtpu: 0.0.40
codegen_flags: <defaults>
</compile_context>

<pallas_src>
import functools

import jax
import jax.numpy as jnp
from jax import lax
from jax.experimental import pallas as pl
from jax.experimental.pallas import tpu as pltpu


def _round_up(x, m):
    return (x + m - 1) // m * m


# ----------------------------------------------------------------------------
# Pallas kernel: fused embedding-gather + Elman RNN (tanh) + classifier.
#   x_proj      = one_hot(tokens) @ E_proj              (E_proj = Emb@Wih^T + b)
#   h_t         = tanh(x_proj[t] + h_{t-1} @ Whh^T)
#   logits      = h_T @ Wcls^T + b_cls
# ----------------------------------------------------------------------------
def rnn_classify_kernel(tok_ref, eproj_ref, whh_ref, wcls_ref, bcls_ref,
                        out_ref, *, T, B_pad):
    # tok_ref:   (T*B_pad, 1)   int32  time-major flattened token ids
    # eproj_ref: (V_pad, D_pad) f32    pre-projected embedding rows
    # whh_ref:   (D_pad, D_pad) f32    Whh^T
    # wcls_ref:  (D_pad, S_pad) f32    Wcls^T
    # bcls_ref:  (1, S_pad)     f32
    # out_ref:   (B_pad, S_pad) f32
    V_pad = eproj_ref.shape[0]
    D_pad = eproj_ref.shape[1]

    # Fused gather + input projection: one-hot built on the VPU, gather done
    # as a single (T*B_pad, V_pad) x (V_pad, D_pad) MXU matmul.
    tok = tok_ref[...]                                              # (T*B_pad, 1)
    lane_ids = lax.broadcasted_iota(jnp.int32, (T * B_pad, V_pad), 1)
    onehot = jnp.where(lane_ids == tok, 1.0, 0.0).astype(jnp.float32)
    x_proj = jnp.dot(onehot, eproj_ref[...],
                     preferred_element_type=jnp.float32)            # (T*B_pad, D_pad)

    whh_t = whh_ref[...]                                            # hoisted

    # Fully unrolled recurrence: per step only one small MXU matmul + EUP tanh.
    h = jnp.zeros((B_pad, D_pad), dtype=jnp.float32)
    for t in range(T):
        xt = x_proj[t * B_pad:(t + 1) * B_pad, :]                   # (B_pad, D_pad)
        h = jnp.tanh(xt + jnp.dot(h, whh_t,
                                  preferred_element_type=jnp.float32))

    logits = (jnp.dot(h, wcls_ref[...], preferred_element_type=jnp.float32)
              + bcls_ref[...])                                      # (B_pad, S_pad)
    out_ref[...] = logits.astype(out_ref.dtype)


def torch_model_forward(x_tokens, params):
    """Inference forward pass (y=None branch): returns logits (B, S)."""
    emb = params["embedding"]          # (V, D), row 0 is zeros (padding_idx=0)
    w_ih = params["w_ih"]              # (D, D)  PyTorch layout (hidden, input)
    w_hh = params["w_hh"]              # (D, D)  PyTorch layout (hidden, hidden)
    b_ih = params["b_ih"]              # (D,)
    b_hh = params["b_hh"]              # (D,)
    w_cls = params["w_cls"]            # (S, D)  PyTorch layout (out, in)
    b_cls = params["b_cls"]            # (S,)

    B, T = x_tokens.shape
    V, D = emb.shape
    S = w_cls.shape[0]

    LANE, SUB = 128, 8
    B_pad = max(_round_up(B, SUB), SUB)
    D_pad = max(_round_up(D, LANE), LANE)
    S_pad = max(_round_up(S, LANE), LANE)
    V_pad = max(_round_up(V, LANE), LANE)
    f32 = jnp.float32

    # --- parameter folding (independent of batch/tokens; amortizable) -------
    emb_p = jnp.zeros((V_pad, D_pad), f32).at[:V, :D].set(emb)
    wih_t = jnp.zeros((D_pad, D_pad), f32).at[:D, :D].set(w_ih.T)
    whh_t = jnp.zeros((D_pad, D_pad), f32).at[:D, :D].set(w_hh.T)
    b_rnn = jnp.zeros((1, D_pad), f32).at[0, :D].set(b_ih + b_hh)
    wcls_t = jnp.zeros((D_pad, S_pad), f32).at[:D, :S].set(w_cls.T)
    bcls_p = jnp.zeros((1, S_pad), f32).at[0, :S].set(b_cls)
    # Embedding rows pre-projected through the input weight + RNN biases so
    # the in-kernel recurrence has no per-step input matmul:
    #   E_proj[v] = emb[v] @ Wih^T + (b_ih + b_hh)
    eproj = jnp.dot(emb_p, wih_t) + b_rnn                           # (V_pad, D_pad)

    # --- per-call glue: time-major, batch-padded token ids (tiny int array) --
    tok_tm = jnp.zeros((T, B_pad), jnp.int32).at[:, :B].set(x_tokens.T)
    tok_flat = tok_tm.reshape(T * B_pad, 1)

    kernel = functools.partial(rnn_classify_kernel, T=T, B_pad=B_pad)

    flops = (2 * T * B_pad * V_pad * D_pad        # gather-as-matmul
             + 2 * T * B_pad * D_pad * D_pad      # recurrence
             + 2 * B_pad * D_pad * S_pad)         # classifier
    bytes_accessed = 4 * (T * B_pad + V_pad * D_pad + D_pad * D_pad
                          + D_pad * S_pad + S_pad + B_pad * S_pad)

    vmem = pl.BlockSpec(memory_space=pltpu.MemorySpace.VMEM)
    out = pl.pallas_call(
        kernel,
        out_shape=jax.ShapeDtypeStruct((B_pad, S_pad), f32),
        in_specs=[vmem] * 5,
        out_specs=vmem,
        compiler_params=pltpu.CompilerParams(
            vmem_limit_bytes=16 * 1024 * 1024),
        cost_estimate=pl.CostEstimate(
            flops=flops,
            transcendentals=T * B_pad * D_pad,
            bytes_accessed=bytes_accessed),
    )(tok_flat, eproj, whh_t, wcls_t, bcls_p)

    return out[:B, :S]


# ----------------------------------------------------------------------------
# Deterministic parameter construction (synthetic; mirrors nn.Module shapes).
# ----------------------------------------------------------------------------
def init_params(key, vocab_size, vector_dim, sentence_length):
    k1, k2, k3, k4, k5, k6, k7 = jax.random.split(key, 7)
    scale = 0.1
    emb = scale * jax.random.normal(k1, (vocab_size, vector_dim), jnp.float32)
    emb = emb.at[0].set(0.0)  # padding_idx=0
    return {
        "embedding": emb,
        "w_ih": scale * jax.random.normal(k2, (vector_dim, vector_dim), jnp.float32),
        "w_hh": scale * jax.random.normal(k3, (vector_dim, vector_dim), jnp.float32),
        "b_ih": scale * jax.random.normal(k4, (vector_dim,), jnp.float32),
        "b_hh": scale * jax.random.normal(k5, (vector_dim,), jnp.float32),
        "w_cls": scale * jax.random.normal(k6, (sentence_length, vector_dim), jnp.float32),
        "b_cls": scale * jax.random.normal(k7, (sentence_length,), jnp.float32),
    }


def reference_forward(x_tokens, params):
    """Pure-JAX reference for correctness check."""
    x = jnp.take(params["embedding"], x_tokens, axis=0)   # (B, T, D)
    B, T, D = x.shape
    h = jnp.zeros((B, D), jnp.float32)
    for t in range(T):
        h = jnp.tanh(x[:, t, :] @ params["w_ih"].T + params["b_ih"]
                     + h @ params["w_hh"].T + params["b_hh"])
    return h @ params["w_cls"].T + params["b_cls"]


if __name__ == "__main__":
    # Small shapes consistent with the module:
    vocab_size = 30        # len(vocab)
    vector_dim = 32        # embedding / hidden dim
    sentence_length = 8    # seq length == number of classes
    batch = 4

    key = jax.random.PRNGKey(0)
    pkey, xkey = jax.random.split(key)
    params = init_params(pkey, vocab_size, vector_dim, sentence_length)

    # Token ids in [0, vocab_size); 0 acts as padding id.
    x_tokens = jax.random.randint(
        xkey, (batch, sentence_length), 0, vocab_size, dtype=jnp.int32)

    logits = torch_model_forward(x_tokens, params)
    logits = jax.block_until_ready(logits)

    ref = reference_forward(x_tokens, params)
    assert logits.shape == (batch, sentence_length)
    assert jnp.allclose(logits, ref, atol=1e-4, rtol=1e-4), "mismatch vs reference"

    # TODO(synk): training branch (nn.CrossEntropyLoss when y is given) is not
    # part of the kernel; only the inference forward (logits) is implemented.
    print("KERNEL_OK")
</pallas_src>

<mosaic_0001>
module attributes {stable_mosaic.version = 11 : i64} {
  func.func @rnn_classify_kernel(%arg0: memref<64x1xi32, #tpu.memory_space<vmem>>, %arg1: memref<128x128xf32, #tpu.memory_space<vmem>>, %arg2: memref<128x128xf32, #tpu.memory_space<vmem>>, %arg3: memref<128x128xf32, #tpu.memory_space<vmem>>, %arg4: memref<1x128xf32, #tpu.memory_space<vmem>>, %arg5: memref<8x128xf32, #tpu.memory_space<vmem>>) attributes {dimension_semantics = [], scalar_prefetch = 0 : i64, scratch_operands = 0 : i64, tpu.core_type = #tpu.core_type<tc>} {
    %c0 = arith.constant 0 : index
    %c0_0 = arith.constant 0 : index
    %0 = vector.load %arg0[%c0, %c0_0] : memref<64x1xi32, #tpu.memory_space<vmem>>, vector<64x1xi32>
    %1 = tpu.iota {dimensions = array<i32: 1>} : vector<64x128xi32>
    %2 = vector.broadcast %0 : vector<64x1xi32> to vector<64x128xi32>
    %3 = arith.cmpi eq, %1, %2 : vector<64x128xi32>
    %cst = arith.constant 1.000000e+00 : f32
    %cst_1 = arith.constant 0.000000e+00 : f32
    %4 = vector.broadcast %cst : f32 to vector<64x128xf32>
    %5 = vector.broadcast %cst_1 : f32 to vector<64x128xf32>
    %6 = arith.select %3, %4, %5 : vector<64x128xi1>, vector<64x128xf32>
    %c0_2 = arith.constant 0 : index
    %c0_3 = arith.constant 0 : index
    %7 = vector.load %arg1[%c0_2, %c0_3] : memref<128x128xf32, #tpu.memory_space<vmem>>, vector<128x128xf32>
    %cst_4 = arith.constant dense<0.000000e+00> : vector<64x128xf32>
    %8 = tpu.matmul %6, %7, %cst_4 {dimension_numbers = #tpu.dot_dimension_numbers<[1], [0], [0], [1], [0, 0, 1, 1], [], []>} : vector<64x128xf32>, vector<128x128xf32>, vector<64x128xf32> -> vector<64x128xf32>
    %c0_5 = arith.constant 0 : index
    %c0_6 = arith.constant 0 : index
    %9 = vector.load %arg2[%c0_5, %c0_6] : memref<128x128xf32, #tpu.memory_space<vmem>>, vector<128x128xf32>
    %cst_7 = arith.constant 0.000000e+00 : f32
    %10 = vector.broadcast %cst_7 : f32 to vector<8x128xf32>
    %11 = vector.extract_strided_slice %8 {offsets = [0, 0], sizes = [8, 128], strides = [1, 1]} : vector<64x128xf32> to vector<8x128xf32>
    %cst_8 = arith.constant dense<0.000000e+00> : vector<8x128xf32>
    %12 = tpu.matmul %10, %9, %cst_8 {dimension_numbers = #tpu.dot_dimension_numbers<[1], [0], [0], [1], [0, 0, 1, 1], [], []>} : vector<8x128xf32>, vector<128x128xf32>, vector<8x128xf32> -> vector<8x128xf32>
    %13 = arith.addf %11, %12 : vector<8x128xf32>
    %14 = math.tanh %13 : vector<8x128xf32>
    %15 = vector.extract_strided_slice %8 {offsets = [8, 0], sizes = [8, 128], strides = [1, 1]} : vector<64x128xf32> to vector<8x128xf32>
    %cst_9 = arith.constant dense<0.000000e+00> : vector<8x128xf32>
    %16 = tpu.matmul %14, %9, %cst_9 {dimension_numbers = #tpu.dot_dimension_numbers<[1], [0], [0], [1], [0, 0, 1, 1], [], []>} : vector<8x128xf32>, vector<128x128xf32>, vector<8x128xf32> -> vector<8x128xf32>
    %17 = arith.addf %15, %16 : vector<8x128xf32>
    %18 = math.tanh %17 : vector<8x128xf32>
    %19 = vector.extract_strided_slice %8 {offsets = [16, 0], sizes = [8, 128], strides = [1, 1]} : vector<64x128xf32> to vector<8x128xf32>
    %cst_10 = arith.constant dense<0.000000e+00> : vector<8x128xf32>
    %20 = tpu.matmul %18, %9, %cst_10 {dimension_numbers = #tpu.dot_dimension_numbers<[1], [0], [0], [1], [0, 0, 1, 1], [], []>} : vector<8x128xf32>, vector<128x128xf32>, vector<8x128xf32> -> vector<8x128xf32>
    %21 = arith.addf %19, %20 : vector<8x128xf32>
    %22 = math.tanh %21 : vector<8x128xf32>
    %23 = vector.extract_strided_slice %8 {offsets = [24, 0], sizes = [8, 128], strides = [1, 1]} : vector<64x128xf32> to vector<8x128xf32>
    %cst_11 = arith.constant dense<0.000000e+00> : vector<8x128xf32>
    %24 = tpu.matmul %22, %9, %cst_11 {dimension_numbers = #tpu.dot_dimension_numbers<[1], [0], [0], [1], [0, 0, 1, 1], [], []>} : vector<8x128xf32>, vector<128x128xf32>, vector<8x128xf32> -> vector<8x128xf32>
    %25 = arith.addf %23, %24 : vector<8x128xf32>
    %26 = math.tanh %25 : vector<8x128xf32>
    %27 = vector.extract_strided_slice %8 {offsets = [32, 0], sizes = [8, 128], strides = [1, 1]} : vector<64x128xf32> to vector<8x128xf32>
    %cst_12 = arith.constant dense<0.000000e+00> : vector<8x128xf32>
    %28 = tpu.matmul %26, %9, %cst_12 {dimension_numbers = #tpu.dot_dimension_numbers<[1], [0], [0], [1], [0, 0, 1, 1], [], []>} : vector<8x128xf32>, vector<128x128xf32>, vector<8x128xf32> -> vector<8x128xf32>
    %29 = arith.addf %27, %28 : vector<8x128xf32>
    %30 = math.tanh %29 : vector<8x128xf32>
    %31 = vector.extract_strided_slice %8 {offsets = [40, 0], sizes = [8, 128], strides = [1, 1]} : vector<64x128xf32> to vector<8x128xf32>
    %cst_13 = arith.constant dense<0.000000e+00> : vector<8x128xf32>
    %32 = tpu.matmul %30, %9, %cst_13 {dimension_numbers = #tpu.dot_dimension_numbers<[1], [0], [0], [1], [0, 0, 1, 1], [], []>} : vector<8x128xf32>, vector<128x128xf32>, vector<8x128xf32> -> vector<8x128xf32>
    %33 = arith.addf %31, %32 : vector<8x128xf32>
    %34 = math.tanh %33 : vector<8x128xf32>
    %35 = vector.extract_strided_slice %8 {offsets = [48, 0], sizes = [8, 128], strides = [1, 1]} : vector<64x128xf32> to vector<8x128xf32>
    %cst_14 = arith.constant dense<0.000000e+00> : vector<8x128xf32>
    %36 = tpu.matmul %34, %9, %cst_14 {dimension_numbers = #tpu.dot_dimension_numbers<[1], [0], [0], [1], [0, 0, 1, 1], [], []>} : vector<8x128xf32>, vector<128x128xf32>, vector<8x128xf32> -> vector<8x128xf32>
    %37 = arith.addf %35, %36 : vector<8x128xf32>
    %38 = math.tanh %37 : vector<8x128xf32>
    %39 = vector.extract_strided_slice %8 {offsets = [56, 0], sizes = [8, 128], strides = [1, 1]} : vector<64x128xf32> to vector<8x128xf32>
    %cst_15 = arith.constant dense<0.000000e+00> : vector<8x128xf32>
    %40 = tpu.matmul %38, %9, %cst_15 {dimension_numbers = #tpu.dot_dimension_numbers<[1], [0], [0], [1], [0, 0, 1, 1], [], []>} : vector<8x128xf32>, vector<128x128xf32>, vector<8x128xf32> -> vector<8x128xf32>
    %41 = arith.addf %39, %40 : vector<8x128xf32>
    %42 = math.tanh %41 : vector<8x128xf32>
    %c0_16 = arith.constant 0 : index
    %c0_17 = arith.constant 0 : index
    %43 = vector.load %arg3[%c0_16, %c0_17] : memref<128x128xf32, #tpu.memory_space<vmem>>, vector<128x128xf32>
    %cst_18 = arith.constant dense<0.000000e+00> : vector<8x128xf32>
    %44 = tpu.matmul %42, %43, %cst_18 {dimension_numbers = #tpu.dot_dimension_numbers<[1], [0], [0], [1], [0, 0, 1, 1], [], []>} : vector<8x128xf32>, vector<128x128xf32>, vector<8x128xf32> -> vector<8x128xf32>
    %c0_19 = arith.constant 0 : index
    %c0_20 = arith.constant 0 : index
    %45 = vector.load %arg4[%c0_19, %c0_20] : memref<1x128xf32, #tpu.memory_space<vmem>>, vector<1x128xf32>
    %46 = vector.broadcast %45 : vector<1x128xf32> to vector<8x128xf32>
    %47 = arith.addf %44, %46 : vector<8x128xf32>
    %c0_21 = arith.constant 0 : index
    %c0_22 = arith.constant 0 : index
    %48 = vector.load %arg5[%c0_21, %c0_22] : memref<8x128xf32, #tpu.memory_space<vmem>>, vector<8x128xf32>
    tpu.vector_store %arg5[%c0_21, %c0_22], %47 {strides = array<i32>} : memref<8x128xf32, #tpu.memory_space<vmem>>, vector<8x128xf32>,
    return
  }
}

</mosaic_0001>

<llo_original>
// kernel: tpu_custom_call.1
$region0: #{tpu_custom_call.1}
  #allocation0 [shape = 'u32[]', space=smem, size = 0x4, offset = 0x4, fixed_abs, tag = 'smem constant byte address 0x4 - core index']
  #allocation1 [shape = 'u32[72,128]{1,0:T(1,128)}', space=vmem, size = 0x9000, scoped, tag = 'internal scratch']
  %s0 = inlined_call_operand.vmem [shape: s32[64,1], index: 0, kind: input, shape index: {}]
  %s1 = inlined_call_operand.hbm [shape: f32[128,128], index: 1, kind: input, shape index: {}]
  %s2 = inlined_call_operand.hbm [shape: f32[128,128], index: 2, kind: input, shape index: {}]
  %s3 = inlined_call_operand.hbm [shape: f32[128,128], index: 3, kind: input, shape index: {}]
  %s4 = inlined_call_operand.vmem [shape: f32[1,128], index: 4, kind: input, shape index: {}]
  %s5 = inlined_call_operand.hbm [shape: f32[8,128], index: 5, kind: output, shape index: {}]
  %s6 = sld [smem:[#allocation0]]
  $region42: #{tpu_custom_call.1} parent=0
    _
  %s8 = ssub.s32 1, %s6
  %s9 = scalar_select 0, %s8, %s6
  $region1: #{tpu_custom_call.1} parent=0
    #allocation2 [shape = 'u8[65536]{0}', space=vmem, size = 0x10000, scoped, tag = 'input window, operand 1, single buffered']
    #allocation3 [shape = 's32[1]{0}', space=sflag, size = 0x4, scoped, tag = 'scoped memory for tpu_custom_call.1']
    #allocation4 [shape = 's32[1]{0}', space=sflag, size = 0x4, scoped, tag = 'scoped memory for tpu_custom_call.1']
    #allocation5 [shape = 'u8[65536]{0}', space=vmem, size = 0x10000, scoped, tag = 'input window, operand 2, single buffered']
    #allocation6 [shape = 's32[1]{0}', space=sflag, size = 0x4, scoped, tag = 'scoped memory for tpu_custom_call.1']
    #allocation7 [shape = 'u8[65536]{0}', space=vmem, size = 0x10000, scoped, tag = 'input window, operand 3, single buffered']
    #allocation8 [shape = 'u8[4096]{0}', space=vmem, size = 0x1000, scoped, tag = 'output window, operand 0, single buffered']
    %10 = vsyncpa [#allocation3], 0
    %11 = vsyncpa [#allocation6], 0
    %12 = vsyncpa [#allocation4], 0
    // Predicated region
    $region2: #{tpu_custom_call.1} parent=1 // pred_check
      _
    $region3: #{tpu_custom_call.1} parent=1 // pred_check_branch
      %14 = sbr.rel (0) target = $region5
    $region4: #{tpu_custom_call.1} parent=1 // pred_region
      _
    $region5: #{tpu_custom_call.1} parent=1 // pred_fallthru
      _
    // Predicated region
    $region6: #{tpu_custom_call.1} parent=1 // pred_check
      _
    $region7: #{tpu_custom_call.1} parent=1 // pred_check_branch
      %16 = sbr.rel (0) target = $region9
    $region8: #{tpu_custom_call.1} parent=1 // pred_region
      %18 = vsyncadd [#allocation3], 0
      %s19 = sshll.u32 %s1, 4
      %s20 = int_to_ptr.hbm [resolvable:$true] %s19
      %s21 = sshll.u32 [#allocation2], 4
      %s22 = int_to_ptr.vmem [resolvable:$true] %s21
      %27 = dma.hbm_to_vmem [thread:$0]  %s20, 2048, %s22, [#allocation3], 128, 128, 8
    $region9: #{tpu_custom_call.1} parent=1 // pred_fallthru
      _
    // Predicated region
    $region10: #{tpu_custom_call.1} parent=1 // pred_check
      _
    $region11: #{tpu_custom_call.1} parent=1 // pred_check_branch
      %29 = sbr.rel (0) target = $region13
    $region12: #{tpu_custom_call.1} parent=1 // pred_region
      %31 = vsyncadd [#allocation6], 0
      %s32 = sshll.u32 %s2, 4
      %s33 = int_to_ptr.hbm [resolvable:$true] %s32
      %s34 = sshll.u32 [#allocation5], 4
      %s35 = int_to_ptr.vmem [resolvable:$true] %s34
      %40 = dma.hbm_to_vmem [thread:$0]  %s33, 2048, %s35, [#allocation6], 128, 128, 8
    $region13: #{tpu_custom_call.1} parent=1 // pred_fallthru
      _
    // Predicated region
    $region14: #{tpu_custom_call.1} parent=1 // pred_check
      _
    $region15: #{tpu_custom_call.1} parent=1 // pred_check_branch
      %42 = sbr.rel (0) target = $region17
    $region16: #{tpu_custom_call.1} parent=1 // pred_region
      %44 = vsyncadd [#allocation6], 0
      %s45 = sshll.u32 %s3, 4
      %s46 = int_to_ptr.hbm [resolvable:$true] %s45
      %s47 = sshll.u32 [#allocation7], 4
      %s48 = int_to_ptr.vmem [resolvable:$true] %s47
      %53 = dma.hbm_to_vmem [thread:$0]  %s46, 2048, %s48, [#allocation6], 128, 128, 8
    $region17: #{tpu_custom_call.1} parent=1 // pred_fallthru
      _
    // Predicated region
    $region18: #{tpu_custom_call.1} parent=1 // pred_check
      _
    $region19: #{tpu_custom_call.1} parent=1 // pred_check_branch
      %55 = sbr.rel (0) target = $region21
    $region20: #{tpu_custom_call.1} parent=1 // pred_region
      _
    $region21: #{tpu_custom_call.1} parent=1 // pred_fallthru
      _
    // Predicated region
    $region22: #{tpu_custom_call.1} parent=1 // pred_check
      _
    $region23: #{tpu_custom_call.1} parent=1 // pred_check_branch
      %57 = sbr.rel (0) target = $region25
    $region24: #{tpu_custom_call.1} parent=1 // pred_region
      %59 = dma.done [#allocation3], 2048
    $region25: #{tpu_custom_call.1} parent=1 // pred_fallthru
      _
    // Predicated region
    $region26: #{tpu_custom_call.1} parent=1 // pred_check
      _
    $region27: #{tpu_custom_call.1} parent=1 // pred_check_branch
      %61 = sbr.rel (0) target = $region29
    $region28: #{tpu_custom_call.1} parent=1 // pred_region
      %63 = dma.done [#allocation6], 2048
    $region29: #{tpu_custom_call.1} parent=1 // pred_fallthru
      _
    // Predicated region
    $region30: #{tpu_custom_call.1} parent=1 // pred_check
      _
    $region31: #{tpu_custom_call.1} parent=1 // pred_check_branch
      %65 = sbr.rel (0) target = $region33
    $region32: #{tpu_custom_call.1} parent=1 // pred_region
      %67 = dma.done [#allocation6], 2048
    $region33: #{tpu_custom_call.1} parent=1 // pred_fallthru
      _
    %v68 = vld [vmem:[%s0] sm:$0xff]
    %v69 = vld [vmem:[%s0 + $0x8] sm:$0xff]
    %v70 = vld [vmem:[%s0 + $0x10] sm:$0xff]
    %v71 = vld [vmem:[%s0 + $0x18] sm:$0xff]
    %v72 = vld [vmem:[%s0 + $0x20] sm:$0xff]
    %v73 = vld [vmem:[%s0 + $0x28] sm:$0xff]
    %v74 = vld [vmem:[%s0 + $0x30] sm:$0xff]
    %v75 = vld [vmem:[%s0 + $0x38] sm:$0xff]
    %v76 = vlaneseq
    %v77 = vand.u32 %v76, 127
    %78 = vset.pattern.permute.xlu0 0
    %79 = vperm.xlu0 %78, %v68
    %v80 = vpop.permute.xlu0 %79
    %81 = vset.pattern.permute.xlu0 0
    %82 = vperm.xlu0 %81, %v69
    %v83 = vpop.permute.xlu0 %82
    %84 = vset.pattern.permute.xlu0 0
    %85 = vperm.xlu0 %84, %v70
    %v86 = vpop.permute.xlu0 %85
    %87 = vset.pattern.permute.xlu0 0
    %88 = vperm.xlu0 %87, %v71
    %v89 = vpop.permute.xlu0 %88
    %90 = vset.pattern.permute.xlu0 0
    %91 = vperm.xlu0 %90, %v72
    %v92 = vpop.permute.xlu0 %91
    %93 = vset.pattern.permute.xlu0 0
    %94 = vperm.xlu0 %93, %v73
    %v95 = vpop.permute.xlu0 %94
    %96 = vset.pattern.permute.xlu0 0
    %97 = vperm.xlu0 %96, %v74
    %v98 = vpop.permute.xlu0 %97
    %99 = vset.pattern.permute.xlu0 0
    %100 = vperm.xlu0 %99, %v75
    %v101 = vpop.permute.xlu0 %100
    %vm102 = vcmp.eq.s32.totalorder %v77, %v80
    %vm103 = vcmp.eq.s32.totalorder %v77, %v83
    %vm104 = vcmp.eq.s32.totalorder %v77, %v86
    %vm105 = vcmp.eq.s32.totalorder %v77, %v89
    %vm106 = vcmp.eq.s32.totalorder %v77, %v92
    %vm107 = vcmp.eq.s32.totalorder %v77, %v95
    %vm108 = vcmp.eq.s32.totalorder %v77, %v98
    %vm109 = vcmp.eq.s32.totalorder %v77, %v101
    %v110 = vsel %vm102, 1.0, 0.0
    %v111 = vsel %vm103, 1.0, 0.0
    %v112 = vsel %vm104, 1.0, 0.0
    %v113 = vsel %vm105, 1.0, 0.0
    %v114 = vsel %vm106, 1.0, 0.0
    %v115 = vsel %vm107, 1.0, 0.0
    %v116 = vsel %vm108, 1.0, 0.0
    %v117 = vsel %vm109, 1.0, 0.0
    %v118 = vld [vmem:[#allocation2] sm:$0xff]
    %v119 = vld [vmem:[#allocation2 + $0x8] sm:$0xff]
    %v120 = vld [vmem:[#allocation2 + $0x10] sm:$0xff]
    %v121 = vld [vmem:[#allocation2 + $0x18] sm:$0xff]
    %v122 = vld [vmem:[#allocation2 + $0x20] sm:$0xff]
    %v123 = vld [vmem:[#allocation2 + $0x28] sm:$0xff]
    %v124 = vld [vmem:[#allocation2 + $0x30] sm:$0xff]
    %v125 = vld [vmem:[#allocation2 + $0x38] sm:$0xff]
    %v126 = vld [vmem:[#allocation2 + $0x40] sm:$0xff]
    %v127 = vld [vmem:[#allocation2 + $0x48] sm:$0xff]
    %v128 = vld [vmem:[#allocation2 + $0x50] sm:$0xff]
    %v129 = vld [vmem:[#allocation2 + $0x58] sm:$0xff]
    %v130 = vld [vmem:[#allocation2 + $0x60] sm:$0xff]
    %v131 = vld [vmem:[#allocation2 + $0x68] sm:$0xff]
    %v132 = vld [vmem:[#allocation2 + $0x70] sm:$0xff]
    %v133 = vld [vmem:[#allocation2 + $0x78] sm:$0xff]
    %134 = vmatpush.msra.mxu0 %v133
    %135 = vmatpush.msra.mxu0 %v132
    %136 = vmatpush.msra.mxu0 %v131
    %137 = vmatpush.msra.mxu0 %v130
    %138 = vmatpush.msra.mxu0 %v129
    %139 = vmatpush.msra.mxu0 %v128
    %140 = vmatpush.msra.mxu0 %v127
    %141 = vmatpush.msra.mxu0 %v126
    %142 = vmatpush.msra.mxu0 %v125
    %143 = vmatpush.msra.mxu0 %v124
    %144 = vmatpush.msra.mxu0 %v123
    %145 = vmatpush.msra.mxu0 %v122
    %146 = vmatpush.msra.mxu0 %v121
    %147 = vmatpush.msra.mxu0 %v120
    %148 = vmatpush.msra.mxu0 %v119
    %149 = vmatpush.msra.mxu0 %v118
    %150 = vmatmul.f32.gmra.mxu0 %v110
    %v151 = vpop.f32.mrf.mxu0
    %v152 = vadd.f32 0.0, %v151
    %153 = vmatmul.f32.gmra.mxu0 %v111
    %v154 = vpop.f32.mrf.mxu0
    %v155 = vadd.f32 0.0, %v154
    %156 = vmatmul.f32.gmra.mxu0 %v112
    %v157 = vpop.f32.mrf.mxu0
    %v158 = vadd.f32 0.0, %v157
    %159 = vmatmul.f32.gmra.mxu0 %v113
    %v160 = vpop.f32.mrf.mxu0
    %v161 = vadd.f32 0.0, %v160
    %162 = vmatmul.f32.gmra.mxu0 %v114
    %v163 = vpop.f32.mrf.mxu0
    %v164 = vadd.f32 0.0, %v163
    %165 = vmatmul.f32.gmra.mxu0 %v115
    %v166 = vpop.f32.mrf.mxu0
    %v167 = vadd.f32 0.0, %v166
    %168 = vmatmul.f32.gmra.mxu0 %v116
    %v169 = vpop.f32.mrf.mxu0
    %v170 = vadd.f32 0.0, %v169
    %171 = vmatmul.f32.gmra.mxu0 %v117
    %v172 = vpop.f32.mrf.mxu0
    %v173 = vadd.f32 0.0, %v172
    %174 = vdwg.mxu0
    %v175 = vld [vmem:[#allocation5] sm:$0xff]
    %v176 = vld [vmem:[#allocation5 + $0x8] sm:$0xff]
    %v177 = vld [vmem:[#allocation5 + $0x10] sm:$0xff]
    %v178 = vld [vmem:[#allocation5 + $0x18] sm:$0xff]
    %v179 = vld [vmem:[#allocation5 + $0x20] sm:$0xff]
    %v180 = vld [vmem:[#allocation5 + $0x28] sm:$0xff]
    %v181 = vld [vmem:[#allocation5 + $0x30] sm:$0xff]
    %v182 = vld [vmem:[#allocation5 + $0x38] sm:$0xff]
    %v183 = vld [vmem:[#allocation5 + $0x40] sm:$0xff]
    %v184 = vld [vmem:[#allocation5 + $0x48] sm:$0xff]
    %v185 = vld [vmem:[#allocation5 + $0x50] sm:$0xff]
    %v186 = vld [vmem:[#allocation5 + $0x58] sm:$0xff]
    %v187 = vld [vmem:[#allocation5 + $0x60] sm:$0xff]
    %v188 = vld [vmem:[#allocation5 + $0x68] sm:$0xff]
    %v189 = vld [vmem:[#allocation5 + $0x70] sm:$0xff]
    %v190 = vld [vmem:[#allocation5 + $0x78] sm:$0xff]
    %191 = vmatpush.msra.mxu0 %v190
    %192 = vmatpush.msra.mxu0 %v189
    %193 = vmatpush.msra.mxu0 %v188
    %194 = vmatpush.msra.mxu0 %v187
    %195 = vmatpush.msra.mxu0 %v186
    %196 = vmatpush.msra.mxu0 %v185
    %197 = vmatpush.msra.mxu0 %v184
    %198 = vmatpush.msra.mxu0 %v183
    %199 = vmatpush.msra.mxu0 %v182
    %200 = vmatpush.msra.mxu0 %v181
    %201 = vmatpush.msra.mxu0 %v180
    %202 = vmatpush.msra.mxu0 %v179
    %203 = vmatpush.msra.mxu0 %v178
    %204 = vmatpush.msra.mxu0 %v177
    %205 = vmatpush.msra.mxu0 %v176
    %206 = vmatpush.msra.mxu0 %v175
    %207 = vmatmul.f32.gmra.mxu0 0.0
    %v208 = vpop.f32.mrf.mxu0
    %v209 = vadd.f32 0.0, %v208
    %210 = vdwg.mxu0
    %v211 = vadd.f32 %v152, %v209
    %v212 = vtanh.pop %v211
    %213 = vmatpush.msra.mxu0 %v190
    %214 = vmatpush.msra.mxu0 %v189
    %215 = vmatpush.msra.mxu0 %v188
    %216 = vmatpush.msra.mxu0 %v187
    %217 = vmatpush.msra.mxu0 %v186
    %218 = vmatpush.msra.mxu0 %v185
    %219 = vmatpush.msra.mxu0 %v184
    %220 = vmatpush.msra.mxu0 %v183
    %221 = vmatpush.msra.mxu0 %v182
    %222 = vmatpush.msra.mxu0 %v181
    %223 = vmatpush.msra.mxu0 %v180
    %224 = vmatpush.msra.mxu0 %v179
    %225 = vmatpush.msra.mxu0 %v178
    %226 = vmatpush.msra.mxu0 %v177
    %227 = vmatpush.msra.mxu0 %v176
    %228 = vmatpush.msra.mxu0 %v175
    %229 = vmatmul.f32.gmra.mxu0 %v212
    %v230 = vpop.f32.mrf.mxu0
    %v231 = vadd.f32 0.0, %v230
    %232 = vdwg.mxu0
    %v233 = vadd.f32 %v155, %v231
    %v234 = vtanh.pop %v233
    %235 = vmatpush.msra.mxu0 %v190
    %236 = vmatpush.msra.mxu0 %v189
    %237 = vmatpush.msra.mxu0 %v188
    %238 = vmatpush.msra.mxu0 %v187
    %239 = vmatpush.msra.mxu0 %v186
    %240 = vmatpush.msra.mxu0 %v185
    %241 = vmatpush.msra.mxu0 %v184
    %242 = vmatpush.msra.mxu0 %v183
    %243 = vmatpush.msra.mxu0 %v182
    %244 = vmatpush.msra.mxu0 %v181
    %245 = vmatpush.msra.mxu0 %v180
    %246 = vmatpush.msra.mxu0 %v179
    %247 = vmatpush.msra.mxu0 %v178
    %248 = vmatpush.msra.mxu0 %v177
    %249 = vmatpush.msra.mxu0 %v176
    %250 = vmatpush.msra.mxu0 %v175
    %251 = vmatmul.f32.gmra.mxu0 %v234
    %v252 = vpop.f32.mrf.mxu0
    %v253 = vadd.f32 0.0, %v252
    %254 = vdwg.mxu0
    %v255 = vadd.f32 %v158, %v253
    %v256 = vtanh.pop %v255
    %257 = vmatpush.msra.mxu0 %v190
    %258 = vmatpush.msra.mxu0 %v189
    %259 = vmatpush.msra.mxu0 %v188
    %260 = vmatpush.msra.mxu0 %v187
    %261 = vmatpush.msra.mxu0 %v186
    %262 = vmatpush.msra.mxu0 %v185
    %263 = vmatpush.msra.mxu0 %v184
    %264 = vmatpush.msra.mxu0 %v183
    %265 = vmatpush.msra.mxu0 %v182
    %266 = vmatpush.msra.mxu0 %v181
    %267 = vmatpush.msra.mxu0 %v180
    %268 = vmatpush.msra.mxu0 %v179
    %269 = vmatpush.msra.mxu0 %v178
    %270 = vmatpush.msra.mxu0 %v177
    %271 = vmatpush.msra.mxu0 %v176
    %272 = vmatpush.msra.mxu0 %v175
    %273 = vmatmul.f32.gmra.mxu0 %v256
    %v274 = vpop.f32.mrf.mxu0
    %v275 = vadd.f32 0.0, %v274
    %276 = vdwg.mxu0
    %v277 = vadd.f32 %v161, %v275
    %v278 = vtanh.pop %v277
    %279 = vmatpush.msra.mxu0 %v190
    %280 = vmatpush.msra.mxu0 %v189
    %281 = vmatpush.msra.mxu0 %v188
    %282 = vmatpush.msra.mxu0 %v187
    %283 = vmatpush.msra.mxu0 %v186
    %284 = vmatpush.msra.mxu0 %v185
    %285 = vmatpush.msra.mxu0 %v184
    %286 = vmatpush.msra.mxu0 %v183
    %287 = vmatpush.msra.mxu0 %v182
    %288 = vmatpush.msra.mxu0 %v181
    %289 = vmatpush.msra.mxu0 %v180
    %290 = vmatpush.msra.mxu0 %v179
    %291 = vmatpush.msra.mxu0 %v178
    %292 = vmatpush.msra.mxu0 %v177
    %293 = vmatpush.msra.mxu0 %v176
    %294 = vmatpush.msra.mxu0 %v175
    %295 = vmatmul.f32.gmra.mxu0 %v278
    %v296 = vpop.f32.mrf.mxu0
    %v297 = vadd.f32 0.0, %v296
    %298 = vdwg.mxu0
    %v299 = vadd.f32 %v164, %v297
    %v300 = vtanh.pop %v299
    %301 = vmatpush.msra.mxu0 %v190
    %302 = vmatpush.msra.mxu0 %v189
    %303 = vmatpush.msra.mxu0 %v188
    %304 = vmatpush.msra.mxu0 %v187
    %305 = vmatpush.msra.mxu0 %v186
    %306 = vmatpush.msra.mxu0 %v185
    %307 = vmatpush.msra.mxu0 %v184
    %308 = vmatpush.msra.mxu0 %v183
    %309 = vmatpush.msra.mxu0 %v182
    %310 = vmatpush.msra.mxu0 %v181
    %311 = vmatpush.msra.mxu0 %v180
    %312 = vmatpush.msra.mxu0 %v179
    %313 = vmatpush.msra.mxu0 %v178
    %314 = vmatpush.msra.mxu0 %v177
    %315 = vmatpush.msra.mxu0 %v176
    %316 = vmatpush.msra.mxu0 %v175
    %317 = vmatmul.f32.gmra.mxu0 %v300
    %v318 = vpop.f32.mrf.mxu0
    %v319 = vadd.f32 0.0, %v318
    %320 = vdwg.mxu0
    %v321 = vadd.f32 %v167, %v319
    %v322 = vtanh.pop %v321
    %323 = vmatpush.msra.mxu0 %v190
    %324 = vmatpush.msra.mxu0 %v189
    %325 = vmatpush.msra.mxu0 %v188
    %326 = vmatpush.msra.mxu0 %v187
    %327 = vmatpush.msra.mxu0 %v186
    %328 = vmatpush.msra.mxu0 %v185
    %329 = vmatpush.msra.mxu0 %v184
    %330 = vmatpush.msra.mxu0 %v183
    %331 = vmatpush.msra.mxu0 %v182
    %332 = vmatpush.msra.mxu0 %v181
    %333 = vmatpush.msra.mxu0 %v180
    %334 = vmatpush.msra.mxu0 %v179
    %335 = vmatpush.msra.mxu0 %v178
    %336 = vmatpush.msra.mxu0 %v177
    %337 = vmatpush.msra.mxu0 %v176
    %338 = vmatpush.msra.mxu0 %v175
    %339 = vmatmul.f32.gmra.mxu0 %v322
    %v340 = vpop.f32.mrf.mxu0
    %v341 = vadd.f32 0.0, %v340
    %342 = vdwg.mxu0
    %v343 = vadd.f32 %v170, %v341
    %v344 = vtanh.pop %v343
    %345 = vmatpush.msra.mxu0 %v190
    %346 = vmatpush.msra.mxu0 %v189
    %347 = vmatpush.msra.mxu0 %v188
    %348 = vmatpush.msra.mxu0 %v187
    %349 = vmatpush.msra.mxu0 %v186
    %350 = vmatpush.msra.mxu0 %v185
    %351 = vmatpush.msra.mxu0 %v184
    %352 = vmatpush.msra.mxu0 %v183
    %353 = vmatpush.msra.mxu0 %v182
    %354 = vmatpush.msra.mxu0 %v181
    %355 = vmatpush.msra.mxu0 %v180
    %356 = vmatpush.msra.mxu0 %v179
    %357 = vmatpush.msra.mxu0 %v178
    %358 = vmatpush.msra.mxu0 %v177
    %359 = vmatpush.msra.mxu0 %v176
    %360 = vmatpush.msra.mxu0 %v175
    %361 = vmatmul.f32.gmra.mxu0 %v344
    %v362 = vpop.f32.mrf.mxu0
    %v363 = vadd.f32 0.0, %v362
    %364 = vdwg.mxu0
    %v365 = vadd.f32 %v173, %v363
    %v366 = vtanh.pop %v365
    %v367 = vld [vmem:[#allocation7] sm:$0xff]
    %v368 = vld [vmem:[#allocation7 + $0x8] sm:$0xff]
    %v369 = vld [vmem:[#allocation7 + $0x10] sm:$0xff]
    %v370 = vld [vmem:[#allocation7 + $0x18] sm:$0xff]
    %v371 = vld [vmem:[#allocation7 + $0x20] sm:$0xff]
    %v372 = vld [vmem:[#allocation7 + $0x28] sm:$0xff]
    %v373 = vld [vmem:[#allocation7 + $0x30] sm:$0xff]
    %v374 = vld [vmem:[#allocation7 + $0x38] sm:$0xff]
    %v375 = vld [vmem:[#allocation7 + $0x40] sm:$0xff]
    %v376 = vld [vmem:[#allocation7 + $0x48] sm:$0xff]
    %v377 = vld [vmem:[#allocation7 + $0x50] sm:$0xff]
    %v378 = vld [vmem:[#allocation7 + $0x58] sm:$0xff]
    %v379 = vld [vmem:[#allocation7 + $0x60] sm:$0xff]
    %v380 = vld [vmem:[#allocation7 + $0x68] sm:$0xff]
    %v381 = vld [vmem:[#allocation7 + $0x70] sm:$0xff]
    %v382 = vld [vmem:[#allocation7 + $0x78] sm:$0xff]
    %v383 = vld [vmem:[%s4] sm:$0x1]
    %v385 = vperm.slane %v383, 0
    %387 = vmatpush.msra.mxu0 %v382
    %388 = vmatpush.msra.mxu0 %v381
    %389 = vmatpush.msra.mxu0 %v380
    %390 = vmatpush.msra.mxu0 %v379
    %391 = vmatpush.msra.mxu0 %v378
    %392 = vmatpush.msra.mxu0 %v377
    %393 = vmatpush.msra.mxu0 %v376
    %394 = vmatpush.msra.mxu0 %v375
    %395 = vmatpush.msra.mxu0 %v374
    %396 = vmatpush.msra.mxu0 %v373
    %397 = vmatpush.msra.mxu0 %v372
    %398 = vmatpush.msra.mxu0 %v371
    %399 = vmatpush.msra.mxu0 %v370
    %400 = vmatpush.msra.mxu0 %v369
    %401 = vmatpush.msra.mxu0 %v368
    %402 = vmatpush.msra.mxu0 %v367
    %403 = vmatmul.f32.gmra.mxu0 %v366
    %v404 = vpop.f32.mrf.mxu0
    %v405 = vadd.f32 %v385, %v404
    %406 = vdwg.mxu0
    %407 = vst [vmem:[#allocation8] sm:$0xff] %v405
    // Predicated region
    $region34: #{tpu_custom_call.1} parent=1 // pred_check
      _
    $region35: #{tpu_custom_call.1} parent=1 // pred_check_branch
      %409 = sbr.rel (0) target = $region37
    $region36: #{tpu_custom_call.1} parent=1 // pred_region
      %411 = vsyncadd [#allocation4], 0
      %s413 = sshll.u32 [#allocation8], 4
      %s414 = int_to_ptr.vmem [resolvable:$true] %s413
      %s415 = sshll.u32 %s5, 4
      %s416 = int_to_ptr.hbm [resolvable:$true] %s415
      %418 = dma.vmem_to_hbm [thread:$0]  %s414, 128, %s416, [#allocation4]
    $region37: #{tpu_custom_call.1} parent=1 // pred_fallthru
      _
    // Predicated region
    $region38: #{tpu_custom_call.1} parent=1 // pred_check
      _
    $region39: #{tpu_custom_call.1} parent=1 // pred_check_branch
      %420 = sbr.rel (0) target = $region41
    $region40: #{tpu_custom_call.1} parent=1 // pred_region
      %422 = dma.done [#allocation4], 128
    $region41: #{tpu_custom_call.1} parent=1 // pred_fallthru
      _
    %423 = vsyncpa [#allocation3], 1
    %424 = vsyncpa [#allocation6], 1
    %425 = vsyncpa [#allocation4], 1

</llo_original>
